<compile_context>
chip_gen: v7x
topology: tpu7x:2x2x1
jax: 0.10.0
libtpu: 0.0.40
codegen_flags: <defaults>
</compile_context>

<pallas_src>
import jax
import jax.numpy as jnp
from jax.experimental import pallas as pl
from jax.experimental.pallas import tpu as pltpu

NEG_BIG = -1e30                           # "-inf" for padded class lanes (exp underflows to 0)
_RESIDENT_S_BUDGET = 40 * 1024 * 1024     # gate for the VMEM-resident-S layout (v7x-safe)
_VMEM_LIMIT_CAP = 48 * 1024 * 1024        # explicit scoped-VMEM cap (< v7x 64 MiB physical)


# --------------------------------------------------------------------------
# helpers
# --------------------------------------------------------------------------
def _round_up(x, m):
    return ((x + m - 1) // m) * m


def _pad2d(a, rows, cols):
    return jnp.pad(a, ((0, rows - a.shape[0]), (0, cols - a.shape[1])))


def _pick_div(dim, candidates):
    """Largest candidate tile that divides `dim` (dim is a multiple of 128)."""
    for c in candidates:
        if dim >= c and dim % c == 0:
            return c
    return dim


def _plan(n):
    """Node padding + propagate tile sizes (shared by prepare_adj / forward)."""
    if n <= 512:
        n_pad = _round_up(n, 8)
        return n_pad, n_pad, n_pad            # single tile, full extent
    # tm=512 feeds the 2x256 MXU; padding nodes to 2*tm keeps the row-tile
    # count even so both v7x TensorCores get equal work.
    n_pad = _round_up(n, 1024)
    return n_pad, 512, 1024


def _vmem_limit(nbytes):
    """Explicit scoped-VMEM limit: enough headroom, below v7x physical VMEM."""
    return int(min(max(nbytes + (8 << 20), 32 << 20), _VMEM_LIMIT_CAP))


# --------------------------------------------------------------------------
# kernel 1: tiled projection matmul  S = X @ W  (bf16 in, f32 accumulate)
# --------------------------------------------------------------------------
def _matmul_kernel_single(a_ref, b_ref, o_ref):
    # single reduction step: no scratch accumulator / init / finalize needed
    o_ref[...] = jnp.dot(a_ref[...], b_ref[...],
                         preferred_element_type=jnp.float32).astype(o_ref.dtype)


def _matmul_kernel_acc(a_ref, b_ref, o_ref, acc_ref):
    @pl.when(pl.program_id(2) == 0)
    def _():
        acc_ref[...] = jnp.zeros_like(acc_ref)

    acc_ref[...] += jnp.dot(a_ref[...], b_ref[...],
                            preferred_element_type=jnp.float32)

    @pl.when(pl.program_id(2) == pl.num_programs(2) - 1)
    def _():
        o_ref[...] = acc_ref[...].astype(o_ref.dtype)


def _matmul(a, b, out_dtype, *, tm):
    m, k = a.shape
    _, n = b.shape
    tk = _pick_div(k, (512, 256, 128))
    tn = _pick_div(n, (256, 128))      # 256-wide output fills the 2x256 MXU (v6e/v7x)

    if k // tk == 1:
        return pl.pallas_call(
            _matmul_kernel_single,
            out_shape=jax.ShapeDtypeStruct((m, n), out_dtype),
            grid_spec=pltpu.PrefetchScalarGridSpec(
                num_scalar_prefetch=0,
                grid=(m // tm, n // tn),
                in_specs=[pl.BlockSpec((tm, k), lambda i, j: (i, 0)),
                          pl.BlockSpec((k, tn), lambda i, j: (0, j))],
                out_specs=pl.BlockSpec((tm, tn), lambda i, j: (i, j))),
            compiler_params=pltpu.CompilerParams(
                dimension_semantics=("parallel", "parallel")),
        )(a, b)

    return pl.pallas_call(
        _matmul_kernel_acc,
        out_shape=jax.ShapeDtypeStruct((m, n), out_dtype),
        grid_spec=pltpu.PrefetchScalarGridSpec(
            num_scalar_prefetch=0,
            grid=(m // tm, n // tn, k // tk),
            in_specs=[pl.BlockSpec((tm, tk), lambda i, j, l: (i, l)),
                      pl.BlockSpec((tk, tn), lambda i, j, l: (l, j))],
            out_specs=pl.BlockSpec((tm, tn), lambda i, j, l: (i, j)),
            scratch_shapes=[pltpu.VMEM((tm, tn), jnp.float32)]),
        compiler_params=pltpu.CompilerParams(
            dimension_semantics=("parallel", "parallel", "arbitrary")),
    )(a, b)


# --------------------------------------------------------------------------
# kernel 2: graph propagation  Z = adj @ S + b  (+ fused epilogue)
# --------------------------------------------------------------------------
def _epilogue(z, activation):
    if activation == "relu":
        return jnp.maximum(z, 0.0)
    if activation == "log_softmax":
        # padded class lanes carry a -1e30 bias -> exp underflows to 0, so the
        # lse over the padded lanes equals the lse over real classes.
        m = jnp.max(z, axis=-1, keepdims=True)
        zm = z - m
        lse = jnp.log(jnp.sum(jnp.exp(zm), axis=-1, keepdims=True))
        return zm - lse
    return z


def _make_prop_kernel_resident(activation, tk):
    """S is VMEM-resident (full array); slice the (tk, f) chunk in-kernel."""
    def kernel(adj_ref, s_ref, b_ref, o_ref, acc_ref):
        l = pl.program_id(1)

        @pl.when(l == 0)
        def _():
            acc_ref[...] = jnp.zeros_like(acc_ref)

        start = pl.multiple_of(l * tk, tk)
        acc_ref[...] += jnp.dot(adj_ref[...], s_ref[pl.ds(start, tk), :],
                                preferred_element_type=jnp.float32)

        @pl.when(l == pl.num_programs(1) - 1)
        def _():
            z = _epilogue(acc_ref[...] + b_ref[...], activation)
            o_ref[...] = z.astype(o_ref.dtype)

    return kernel


def _make_prop_kernel_streamed(activation):
    """Fallback: S is streamed per (tk, f) block from HBM."""
    def kernel(adj_ref, s_ref, b_ref, o_ref, acc_ref):
        l = pl.program_id(1)

        @pl.when(l == 0)
        def _():
            acc_ref[...] = jnp.zeros_like(acc_ref)

        acc_ref[...] += jnp.dot(adj_ref[...], s_ref[...],
                                preferred_element_type=jnp.float32)

        @pl.when(l == pl.num_programs(1) - 1)
        def _():
            z = _epilogue(acc_ref[...] + b_ref[...], activation)
            o_ref[...] = z.astype(o_ref.dtype)

    return kernel


def _propagate(adj, s, b, out_dtype, activation, *, tm, tk):
    n = adj.shape[0]
    f = s.shape[1]
    out_bytes = jnp.dtype(out_dtype).itemsize

    # Resident-S VMEM estimate (conservative: assume everything double-buffered).
    resident_need = (2 * n * f * 2                 # resident S (bf16)
                     + 2 * tm * tk * 2             # adj tile (bf16), double-buffered
                     + 2 * tm * f * out_bytes      # output tile, double-buffered
                     + tm * f * 4                  # f32 accumulator
                     + 2 * 8 * f * 4)              # bias

    if resident_need <= _RESIDENT_S_BUDGET:
        return pl.pallas_call(
            _make_prop_kernel_resident(activation, tk),
            out_shape=jax.ShapeDtypeStruct((n, f), out_dtype),
            grid_spec=pltpu.PrefetchScalarGridSpec(
                num_scalar_prefetch=0,
                grid=(n // tm, n // tk),
                in_specs=[pl.BlockSpec((tm, tk), lambda i, l: (i, l)),
                          pl.BlockSpec((n, f), lambda i, l: (0, 0)),   # VMEM-resident S
                          pl.BlockSpec((1, f), lambda i, l: (0, 0))],
                out_specs=pl.BlockSpec((tm, f), lambda i, l: (i, 0)),
                scratch_shapes=[pltpu.VMEM((tm, f), jnp.float32)]),
            compiler_params=pltpu.CompilerParams(
                dimension_semantics=("parallel", "arbitrary"),
                vmem_limit_bytes=_vmem_limit(resident_need)),
        )(adj, s, b)

    # Very large graphs: stream S per row tile, with a bigger tm to cut the
    # re-read factor (S is re-read n/tm times from HBM).
    tm_s = 1024 if (n >= 1024 and n % 1024 == 0) else tm
    streamed_need = (2 * tm_s * tk * 2
                     + 2 * tk * f * 2
                     + 2 * tm_s * f * out_bytes
                     + tm_s * f * 4
                     + 2 * 8 * f * 4)
    return pl.pallas_call(
        _make_prop_kernel_streamed(activation),
        out_shape=jax.ShapeDtypeStruct((n, f), out_dtype),
        grid_spec=pltpu.PrefetchScalarGridSpec(
            num_scalar_prefetch=0,
            grid=(n // tm_s, n // tk),
            in_specs=[pl.BlockSpec((tm_s, tk), lambda i, l: (i, l)),
                      pl.BlockSpec((tk, f), lambda i, l: (l, 0)),
                      pl.BlockSpec((1, f), lambda i, l: (0, 0))],
            out_specs=pl.BlockSpec((tm_s, f), lambda i, l: (i, 0)),
            scratch_shapes=[pltpu.VMEM((tm_s, f), jnp.float32)]),
        compiler_params=pltpu.CompilerParams(
            dimension_semantics=("parallel", "arbitrary"),
            vmem_limit_bytes=_vmem_limit(streamed_need)),
    )(adj, s, b)


# --------------------------------------------------------------------------
# GCN forward
# --------------------------------------------------------------------------
def prepare_adj(adj):
    """Pad the dense row-normalized adjacency and cast to bf16 ONCE per graph.
    Hoisted out of the forward: avoids an extra N^2 HBM pass per call."""
    n = adj.shape[0]
    n_pad, _, _ = _plan(n)
    return _pad2d(adj, n_pad, n_pad).astype(jnp.bfloat16)


@jax.jit
def gcn_forward(x, adj_p, w1, b1, w2, b2):
    """adj_p must come from prepare_adj(adj)."""
    n, nfeat = x.shape
    nhid = w1.shape[1]
    nclass = w2.shape[1]

    n_pad, tm, tk = _plan(n)
    assert adj_p.shape == (n_pad, n_pad), "pass adj through prepare_adj() first"

    f_pad = _round_up(nfeat, 128)
    h_pad = _round_up(nhid, 128)
    c_pad = _round_up(nclass, 128)

    # pad (lane-dense 128-multiples on feature dims) and cast MXU operands to
    # bf16; biases stay f32.
    x_p = _pad2d(x, n_pad, f_pad).astype(jnp.bfloat16)
    w1_p = _pad2d(w1, f_pad, h_pad).astype(jnp.bfloat16)
    w2_p = _pad2d(w2, h_pad, c_pad).astype(jnp.bfloat16)
    b1_p = _pad2d(b1.reshape(1, -1).astype(jnp.float32), 1, h_pad)
    b2_p = jnp.full((1, c_pad), NEG_BIG, jnp.float32)
    b2_p = b2_p.at[:, :nclass].set(b2.reshape(1, -1).astype(jnp.float32))

    # ---- layer 1: h = relu(adj @ (x @ W1) + b1) ----
    s1 = _matmul(x_p, w1_p, jnp.bfloat16, tm=tm)                     # [n_pad, h_pad]
    h1 = _propagate(adj_p, s1, b1_p, jnp.bfloat16, "relu", tm=tm, tk=tk)
    # TODO(synk): F.dropout in training mode is not implemented (eval => identity).

    # ---- layer 2: z = adj @ (h @ W2) + b2 ; out = log_softmax(z) ----
    s2 = _matmul(h1, w2_p, jnp.bfloat16, tm=tm)                      # [n_pad, c_pad]
    z = _propagate(adj_p, s2, b2_p, jnp.float32, "log_softmax", tm=tm, tk=tk)

    return z[:n, :nclass]


# --------------------------------------------------------------------------
# init + reference
# --------------------------------------------------------------------------
def init_params(key, nfeat, nhid, nclass):
    """uniform(-stdv, stdv) with stdv = 1/sqrt(out_features), like
    GraphConvolution.reset_parameters."""
    k1, k2, k3, k4 = jax.random.split(key, 4)
    stdv1 = 1.0 / jnp.sqrt(jnp.float32(nhid))
    stdv2 = 1.0 / jnp.sqrt(jnp.float32(nclass))
    w1 = jax.random.uniform(k1, (nfeat, nhid), jnp.float32, -stdv1, stdv1)
    b1 = jax.random.uniform(k2, (1, nhid), jnp.float32, -stdv1, stdv1)
    w2 = jax.random.uniform(k3, (nhid, nclass), jnp.float32, -stdv2, stdv2)
    b2 = jax.random.uniform(k4, (1, nclass), jnp.float32, -stdv2, stdv2)
    return w1, b1, w2, b2


def reference_forward_matched(x, adj, w1, b1, w2, b2):
    """JAX reference using the same bf16-in / f32-accumulate precision policy."""
    xb, adjb = x.astype(jnp.bfloat16), adj.astype(jnp.bfloat16)
    w1b, w2b = w1.astype(jnp.bfloat16), w2.astype(jnp.bfloat16)
    s1 = jnp.dot(xb, w1b, preferred_element_type=jnp.float32).astype(jnp.bfloat16)
    h1 = jnp.maximum(jnp.dot(adjb, s1, preferred_element_type=jnp.float32) + b1,
                     0.0).astype(jnp.bfloat16)
    s2 = jnp.dot(h1, w2b, preferred_element_type=jnp.float32).astype(jnp.bfloat16)
    z = jnp.dot(adjb, s2, preferred_element_type=jnp.float32) + b2
    return jax.nn.log_softmax(z, axis=1)


# --------------------------------------------------------------------------
if __name__ == "__main__":
    N, NFEAT, NHID, NCLASS = 16, 32, 32, 8

    key = jax.random.PRNGKey(0)
    kx, kadj, kp = jax.random.split(key, 3)

    x = jax.random.normal(kx, (N, NFEAT), jnp.float32)

    # Row-normalized adjacency (self-loops + random symmetric links).
    a = (jax.random.uniform(kadj, (N, N)) > 0.7).astype(jnp.float32)
    a = jnp.maximum(a, a.T) + jnp.eye(N, dtype=jnp.float32)
    adj = a / jnp.sum(a, axis=1, keepdims=True)

    w1, b1, w2, b2 = init_params(kp, NFEAT, NHID, NCLASS)

    adj_p = prepare_adj(adj)                       # once per (static) graph
    out = jax.block_until_ready(gcn_forward(x, adj_p, w1, b1, w2, b2))

    ref = reference_forward_matched(x, adj, w1, b1, w2, b2)
    assert out.shape == (N, NCLASS)
    assert jnp.allclose(out, ref, atol=1e-2, rtol=1e-2), "mismatch vs JAX reference"
    # log_softmax sanity: each row's probabilities sum to 1
    assert jnp.allclose(jnp.sum(jnp.exp(out), axis=1), 1.0, atol=1e-3)

    print("KERNEL_OK")
</pallas_src>

<mosaic_0001>
module attributes {stable_mosaic.version = 11 : i64} {
  func.func @kernel(%arg0: i32, %arg1: i32, %arg2: memref<16x16xbf16, #tpu.memory_space<vmem>>, %arg3: memref<16x128xbf16, #tpu.memory_space<vmem>>, %arg4: memref<1x128xf32, #tpu.memory_space<vmem>>, %arg5: memref<16x128xbf16, #tpu.memory_space<vmem>>, %arg6: memref<16x128xf32, #tpu.memory_space<vmem>>) attributes {dimension_semantics = [#tpu.dimension_semantics<parallel>, #tpu.dimension_semantics<arbitrary>], iteration_bounds = array<i64: 1, 1>, scalar_prefetch = 0 : i64, scratch_operands = 1 : i64, tpu.core_type = #tpu.core_type<tc>, window_params = [{transform_indices = @transform_0, window_bounds = array<i64: 16, 16>}, {pipeline_mode = #tpu.pipeline_mode<synchronous>, transform_indices = @transform_1, window_bounds = array<i64: 16, 128>}, {pipeline_mode = #tpu.pipeline_mode<synchronous>, transform_indices = @transform_2, window_bounds = array<i64: 1, 128>}, {transform_indices = @transform_3, window_bounds = array<i64: 16, 128>}]} {
    %c0_i32 = arith.constant 0 : i32
    %0 = arith.cmpi eq, %arg1, %c0_i32 : i32
    %1 = arith.extui %0 : i1 to i32
    %c0_i32_0 = arith.constant 0 : i32
    %2 = arith.cmpi ne, %1, %c0_i32_0 : i32
    scf.if %2 {
      %cst_9 = arith.constant 0.000000e+00 : f32
      %15 = vector.broadcast %cst_9 : f32 to vector<16x128xf32>
      %c0_10 = arith.constant 0 : index
      %c0_11 = arith.constant 0 : index
      %16 = vector.load %arg6[%c0_10, %c0_11] : memref<16x128xf32, #tpu.memory_space<vmem>>, vector<16x128xf32>
      tpu.vector_store %arg6[%c0_10, %c0_11], %15 {strides = array<i32>} : memref<16x128xf32, #tpu.memory_space<vmem>>, vector<16x128xf32>,
    } else {
    }
    %c16_i32 = arith.constant 16 : i32
    %3 = arith.muli %arg1, %c16_i32 : i32
    %4 = tpu.assume_multiple %3, 16 : i32
    %c0 = arith.constant 0 : index
    %c0_1 = arith.constant 0 : index
    %5 = vector.load %arg6[%c0, %c0_1] : memref<16x128xf32, #tpu.memory_space<vmem>>, vector<16x128xf32>
    %c0_2 = arith.constant 0 : index
    %c0_3 = arith.constant 0 : index
    %6 = vector.load %arg2[%c0_2, %c0_3] : memref<16x16xbf16, #tpu.memory_space<vmem>>, vector<16x16xbf16>
    %7 = arith.index_cast %4 : i32 to index
    %c0_4 = arith.constant 0 : index
    %8 = vector.load %arg3[%7, %c0_4] : memref<16x128xbf16, #tpu.memory_space<vmem>>, vector<16x128xbf16>
    %cst = arith.constant dense<0.000000e+00> : vector<16x128xf32>
    %9 = tpu.matmul %6, %8, %cst {dimension_numbers = #tpu.dot_dimension_numbers<[1], [0], [0], [1], [0, 0, 1, 1], [], []>} : vector<16x16xbf16>, vector<16x128xbf16>, vector<16x128xf32> -> vector<16x128xf32>
    %10 = arith.addf %5, %9 : vector<16x128xf32>
    %c0_5 = arith.constant 0 : index
    %c0_6 = arith.constant 0 : index
    %11 = vector.load %arg6[%c0_5, %c0_6] : memref<16x128xf32, #tpu.memory_space<vmem>>, vector<16x128xf32>
    tpu.vector_store %arg6[%c0_5, %c0_6], %10 {strides = array<i32>} : memref<16x128xf32, #tpu.memory_space<vmem>>, vector<16x128xf32>,
    %c0_i32_7 = arith.constant 0 : i32
    %12 = arith.cmpi eq, %arg1, %c0_i32_7 : i32
    %13 = arith.extui %12 : i1 to i32
    %c0_i32_8 = arith.constant 0 : i32
    %14 = arith.cmpi ne, %13, %c0_i32_8 : i32
    scf.if %14 {
      %c0_9 = arith.constant 0 : index
      %c0_10 = arith.constant 0 : index
      %15 = vector.load %arg6[%c0_9, %c0_10] : memref<16x128xf32, #tpu.memory_space<vmem>>, vector<16x128xf32>
      %c0_11 = arith.constant 0 : index
      %c0_12 = arith.constant 0 : index
      %16 = vector.load %arg4[%c0_11, %c0_12] : memref<1x128xf32, #tpu.memory_space<vmem>>, vector<1x128xf32>
      %17 = vector.broadcast %16 : vector<1x128xf32> to vector<16x128xf32>
      %18 = arith.addf %15, %17 : vector<16x128xf32>
      %cst_13 = arith.constant 0.000000e+00 : f32
      %19 = vector.broadcast %cst_13 : f32 to vector<16x128xf32>
      %20 = arith.maximumf %18, %19 : vector<16x128xf32>
      %21 = arith.truncf %20 : vector<16x128xf32> to vector<16x128xbf16>
      %c0_14 = arith.constant 0 : index
      %c0_15 = arith.constant 0 : index
      %22 = vector.load %arg5[%c0_14, %c0_15] : memref<16x128xbf16, #tpu.memory_space<vmem>>, vector<16x128xbf16>
      tpu.vector_store %arg5[%c0_14, %c0_15], %21 {strides = array<i32>} : memref<16x128xbf16, #tpu.memory_space<vmem>>, vector<16x128xbf16>,
    } else {
    }
    return
  }
  func.func @transform_0(%arg0: i32, %arg1: i32) -> (i32, i32) {
    %c0_i32 = arith.constant 0 : i32
    return %arg0, %arg1 : i32, i32
  }
  func.func @transform_1(%arg0: i32, %arg1: i32) -> (i32, i32) {
    %c0_i32 = arith.constant 0 : i32
    %c0_i32_0 = arith.constant 0 : i32
    %c0_i32_1 = arith.constant 0 : i32
    return %c0_i32, %c0_i32_0 : i32, i32
  }
  func.func @transform_2(%arg0: i32, %arg1: i32) -> (i32, i32) {
    %c0_i32 = arith.constant 0 : i32
    %c0_i32_0 = arith.constant 0 : i32
    %c0_i32_1 = arith.constant 0 : i32
    return %c0_i32, %c0_i32_0 : i32, i32
  }
  func.func @transform_3(%arg0: i32, %arg1: i32) -> (i32, i32) {
    %c0_i32 = arith.constant 0 : i32
    %c0_i32_0 = arith.constant 0 : i32
    return %arg0, %c0_i32 : i32, i32
  }
}

module attributes {stable_mosaic.version = 11 : i64} {
  func.func @_matmul_kernel_single(%arg0: i32, %arg1: i32, %arg2: memref<16x128xbf16, #tpu.memory_space<vmem>>, %arg3: memref<128x128xbf16, #tpu.memory_space<vmem>>, %arg4: memref<16x128xbf16, #tpu.memory_space<vmem>>) attributes {dimension_semantics = [#tpu.dimension_semantics<parallel>, #tpu.dimension_semantics<parallel>], iteration_bounds = array<i64: 1, 1>, scalar_prefetch = 0 : i64, scratch_operands = 0 : i64, tpu.core_type = #tpu.core_type<tc>, window_params = [{transform_indices = @transform_0, window_bounds = array<i64: 16, 128>}, {transform_indices = @transform_1, window_bounds = array<i64: 128, 128>}, {transform_indices = @transform_2, window_bounds = array<i64: 16, 128>}]} {
    %c0 = arith.constant 0 : index
    %c0_0 = arith.constant 0 : index
    %0 = vector.load %arg2[%c0, %c0_0] : memref<16x128xbf16, #tpu.memory_space<vmem>>, vector<16x128xbf16>
    %c0_1 = arith.constant 0 : index
    %c0_2 = arith.constant 0 : index
    %1 = vector.load %arg3[%c0_1, %c0_2] : memref<128x128xbf16, #tpu.memory_space<vmem>>, vector<128x128xbf16>
    %cst = arith.constant dense<0.000000e+00> : vector<16x128xf32>
    %2 = tpu.matmul %0, %1, %cst {dimension_numbers = #tpu.dot_dimension_numbers<[1], [0], [0], [1], [0, 0, 1, 1], [], []>} : vector<16x128xbf16>, vector<128x128xbf16>, vector<16x128xf32> -> vector<16x128xf32>
    %3 = arith.truncf %2 : vector<16x128xf32> to vector<16x128xbf16>
    %c0_3 = arith.constant 0 : index
    %c0_4 = arith.constant 0 : index
    %4 = vector.load %arg4[%c0_3, %c0_4] : memref<16x128xbf16, #tpu.memory_space<vmem>>, vector<16x128xbf16>
    tpu.vector_store %arg4[%c0_3, %c0_4], %3 {strides = array<i32>} : memref<16x128xbf16, #tpu.memory_space<vmem>>, vector<16x128xbf16>,
    return
  }
  func.func @transform_0(%arg0: i32, %arg1: i32) -> (i32, i32) {
    %c0_i32 = arith.constant 0 : i32
    %c0_i32_0 = arith.constant 0 : i32
    return %arg0, %c0_i32 : i32, i32
  }
  func.func @transform_1(%arg0: i32, %arg1: i32) -> (i32, i32) {
    %c0_i32 = arith.constant 0 : i32
    %c0_i32_0 = arith.constant 0 : i32
    return %c0_i32, %arg1 : i32, i32
  }
  func.func @transform_2(%arg0: i32, %arg1: i32) -> (i32, i32) {
    %c0_i32 = arith.constant 0 : i32
    return %arg0, %arg1 : i32, i32
  }
}

module attributes {stable_mosaic.version = 11 : i64} {
  func.func @kernel(%arg0: i32, %arg1: i32, %arg2: memref<16x16xbf16, #tpu.memory_space<vmem>>, %arg3: memref<16x128xbf16, #tpu.memory_space<vmem>>, %arg4: memref<1x128xf32, #tpu.memory_space<vmem>>, %arg5: memref<16x128xf32, #tpu.memory_space<vmem>>, %arg6: memref<16x128xf32, #tpu.memory_space<vmem>>) attributes {dimension_semantics = [#tpu.dimension_semantics<parallel>, #tpu.dimension_semantics<arbitrary>], iteration_bounds = array<i64: 1, 1>, scalar_prefetch = 0 : i64, scratch_operands = 1 : i64, tpu.core_type = #tpu.core_type<tc>, window_params = [{transform_indices = @transform_0, window_bounds = array<i64: 16, 16>}, {pipeline_mode = #tpu.pipeline_mode<synchronous>, transform_indices = @transform_1, window_bounds = array<i64: 16, 128>}, {pipeline_mode = #tpu.pipeline_mode<synchronous>, transform_indices = @transform_2, window_bounds = array<i64: 1, 128>}, {transform_indices = @transform_3, window_bounds = array<i64: 16, 128>}]} {
    %c0_i32 = arith.constant 0 : i32
    %0 = arith.cmpi eq, %arg1, %c0_i32 : i32
    %1 = arith.extui %0 : i1 to i32
    %c0_i32_0 = arith.constant 0 : i32
    %2 = arith.cmpi ne, %1, %c0_i32_0 : i32
    scf.if %2 {
      %cst_9 = arith.constant 0.000000e+00 : f32
      %15 = vector.broadcast %cst_9 : f32 to vector<16x128xf32>
      %c0_10 = arith.constant 0 : index
      %c0_11 = arith.constant 0 : index
      %16 = vector.load %arg6[%c0_10, %c0_11] : memref<16x128xf32, #tpu.memory_space<vmem>>, vector<16x128xf32>
      tpu.vector_store %arg6[%c0_10, %c0_11], %15 {strides = array<i32>} : memref<16x128xf32, #tpu.memory_space<vmem>>, vector<16x128xf32>,
    } else {
    }
    %c16_i32 = arith.constant 16 : i32
    %3 = arith.muli %arg1, %c16_i32 : i32
    %4 = tpu.assume_multiple %3, 16 : i32
    %c0 = arith.constant 0 : index
    %c0_1 = arith.constant 0 : index
    %5 = vector.load %arg6[%c0, %c0_1] : memref<16x128xf32, #tpu.memory_space<vmem>>, vector<16x128xf32>
    %c0_2 = arith.constant 0 : index
    %c0_3 = arith.constant 0 : index
    %6 = vector.load %arg2[%c0_2, %c0_3] : memref<16x16xbf16, #tpu.memory_space<vmem>>, vector<16x16xbf16>
    %7 = arith.index_cast %4 : i32 to index
    %c0_4 = arith.constant 0 : index
    %8 = vector.load %arg3[%7, %c0_4] : memref<16x128xbf16, #tpu.memory_space<vmem>>, vector<16x128xbf16>
    %cst = arith.constant dense<0.000000e+00> : vector<16x128xf32>
    %9 = tpu.matmul %6, %8, %cst {dimension_numbers = #tpu.dot_dimension_numbers<[1], [0], [0], [1], [0, 0, 1, 1], [], []>} : vector<16x16xbf16>, vector<16x128xbf16>, vector<16x128xf32> -> vector<16x128xf32>
    %10 = arith.addf %5, %9 : vector<16x128xf32>
    %c0_5 = arith.constant 0 : index
    %c0_6 = arith.constant 0 : index
    %11 = vector.load %arg6[%c0_5, %c0_6] : memref<16x128xf32, #tpu.memory_space<vmem>>, vector<16x128xf32>
    tpu.vector_store %arg6[%c0_5, %c0_6], %10 {strides = array<i32>} : memref<16x128xf32, #tpu.memory_space<vmem>>, vector<16x128xf32>,
    %c0_i32_7 = arith.constant 0 : i32
    %12 = arith.cmpi eq, %arg1, %c0_i32_7 : i32
    %13 = arith.extui %12 : i1 to i32
    %c0_i32_8 = arith.constant 0 : i32
    %14 = arith.cmpi ne, %13, %c0_i32_8 : i32
    scf.if %14 {
      %c0_9 = arith.constant 0 : index
      %c0_10 = arith.constant 0 : index
      %15 = vector.load %arg6[%c0_9, %c0_10] : memref<16x128xf32, #tpu.memory_space<vmem>>, vector<16x128xf32>
      %c0_11 = arith.constant 0 : index
      %c0_12 = arith.constant 0 : index
      %16 = vector.load %arg4[%c0_11, %c0_12] : memref<1x128xf32, #tpu.memory_space<vmem>>, vector<1x128xf32>
      %17 = vector.broadcast %16 : vector<1x128xf32> to vector<16x128xf32>
      %18 = arith.addf %15, %17 : vector<16x128xf32>
      %cst_13 = arith.constant dense<0xFF800000> : vector<16xf32>
      %19 = vector.multi_reduction <maximumf>, %18, %cst_13 [1] : vector<16x128xf32> to vector<16xf32>
      %20 = vector.shape_cast %19 : vector<16xf32> to vector<16x1xf32>
      %21 = vector.broadcast %20 : vector<16x1xf32> to vector<16x128xf32>
      %22 = arith.subf %18, %21 : vector<16x128xf32>
      %23 = math.exp %22 : vector<16x128xf32>
      %cst_14 = arith.constant dense<0.000000e+00> : vector<16xf32>
      %24 = vector.multi_reduction <add>, %23, %cst_14 [1] : vector<16x128xf32> to vector<16xf32>
      %25 = vector.shape_cast %24 : vector<16xf32> to vector<16x1xf32>
      %26 = math.log %25 : vector<16x1xf32>
      %27 = vector.broadcast %26 : vector<16x1xf32> to vector<16x128xf32>
      %28 = arith.subf %22, %27 : vector<16x128xf32>
      %c0_15 = arith.constant 0 : index
      %c0_16 = arith.constant 0 : index
      %29 = vector.load %arg5[%c0_15, %c0_16] : memref<16x128xf32, #tpu.memory_space<vmem>>, vector<16x128xf32>
      tpu.vector_store %arg5[%c0_15, %c0_16], %28 {strides = array<i32>} : memref<16x128xf32, #tpu.memory_space<vmem>>, vector<16x128xf32>,
    } else {
    }
    return
  }
  func.func @transform_0(%arg0: i32, %arg1: i32) -> (i32, i32) {
    %c0_i32 = arith.constant 0 : i32
    return %arg0, %arg1 : i32, i32
  }
  func.func @transform_1(%arg0: i32, %arg1: i32) -> (i32, i32) {
    %c0_i32 = arith.constant 0 : i32
    %c0_i32_0 = arith.constant 0 : i32
    %c0_i32_1 = arith.constant 0 : i32
    return %c0_i32, %c0_i32_0 : i32, i32
  }
  func.func @transform_2(%arg0: i32, %arg1: i32) -> (i32, i32) {
    %c0_i32 = arith.constant 0 : i32
    %c0_i32_0 = arith.constant 0 : i32
    %c0_i32_1 = arith.constant 0 : i32
    return %c0_i32, %c0_i32_0 : i32, i32
  }
  func.func @transform_3(%arg0: i32, %arg1: i32) -> (i32, i32) {
    %c0_i32 = arith.constant 0 : i32
    %c0_i32_0 = arith.constant 0 : i32
    return %arg0, %c0_i32 : i32, i32
  }
}

</mosaic_0001>

<llo_original>
// kernel: gcn_forward.4
$region0: #{gcn_forward.4}
  #allocation0 [shape = 'u32[]', space=smem, size = 0x4, offset = 0x4, fixed_abs, tag = 'smem constant byte address 0x4 - core index']
  #allocation1 [shape = 'u32[144,128]{1,0:T(1,128)}', space=vmem, size = 0x12000, scoped, tag = 'internal scratch']
  %s0 = inlined_call_operand.vmem [shape: bf16[16,128], index: 0, kind: input, shape index: {}]
  %s1 = inlined_call_operand.vmem [shape: bf16[128,128], index: 1, kind: input, shape index: {}]
  %s2 = inlined_call_operand.vmem [shape: bf16[16,128], index: 2, kind: output, shape index: {}]
  %s3 = sld [smem:[#allocation0]]
  $region18: #{gcn_forward.4} parent=0
    _
  %s5 = ssub.s32 1, %s3
  %s6 = scalar_select 0, %s5, %s3
  // Predicated region
  $region2: #{gcn_forward.4} parent=0 // pred_check
    _
  $region3: #{gcn_forward.4} parent=0 // pred_check_branch
    %8 = sbr.rel (0) target = $region5
  $region4: #{gcn_forward.4} parent=0 // pred_region
    _
  $region5: #{gcn_forward.4} parent=0 // pred_fallthru
    _
  // Predicated region
  $region6: #{gcn_forward.4} parent=0 // pred_check
    _
  $region7: #{gcn_forward.4} parent=0 // pred_check_branch
    %10 = sbr.rel (0) target = $region9
  $region8: #{gcn_forward.4} parent=0 // pred_region
    _
  $region9: #{gcn_forward.4} parent=0 // pred_fallthru
    _
  %v12 = vld [vmem:[%s0] sm:$0xf]
  %v13 = vld [vmem:[%s0 + $0x4] sm:$0xf]
  %v14 = vld [vmem:[%s1] sm:$0xf]
  %v15 = vld [vmem:[%s1 + $0x4] sm:$0xf]
  %v16 = vld [vmem:[%s1 + $0x8] sm:$0xf]
  %v17 = vld [vmem:[%s1 + $0xc] sm:$0xf]
  %v18 = vld [vmem:[%s1 + $0x10] sm:$0xf]
  %v19 = vld [vmem:[%s1 + $0x14] sm:$0xf]
  %v20 = vld [vmem:[%s1 + $0x18] sm:$0xf]
  %v21 = vld [vmem:[%s1 + $0x1c] sm:$0xf]
  %v22 = vld [vmem:[%s1 + $0x20] sm:$0xf]
  %v23 = vld [vmem:[%s1 + $0x24] sm:$0xf]
  %v24 = vld [vmem:[%s1 + $0x28] sm:$0xf]
  %v25 = vld [vmem:[%s1 + $0x2c] sm:$0xf]
  %v26 = vld [vmem:[%s1 + $0x30] sm:$0xf]
  %v27 = vld [vmem:[%s1 + $0x34] sm:$0xf]
  %v28 = vld [vmem:[%s1 + $0x38] sm:$0xf]
  %v29 = vld [vmem:[%s1 + $0x3c] sm:$0xf]
  %v32 = vunpack.c.l.b16 %v12
  %v33 = vunpack.c.l.b16 %v13
  %v34 = vpack.c.b16 %v33, %v32
  %v52 = vunpack.c.l.b16 %v14
  %v53 = vunpack.c.l.b16 %v15
  %v54 = vunpack.c.l.b16 %v16
  %v55 = vunpack.c.l.b16 %v17
  %v56 = vunpack.c.l.b16 %v18
  %v57 = vunpack.c.l.b16 %v19
  %v58 = vunpack.c.l.b16 %v20
  %v59 = vunpack.c.l.b16 %v21
  %v60 = vunpack.c.l.b16 %v22
  %v61 = vunpack.c.l.b16 %v23
  %v62 = vunpack.c.l.b16 %v24
  %v63 = vunpack.c.l.b16 %v25
  %v64 = vunpack.c.l.b16 %v26
  %v65 = vunpack.c.l.b16 %v27
  %v66 = vunpack.c.l.b16 %v28
  %v67 = vunpack.c.l.b16 %v29
  %v68 = vpack.c.b16 %v53, %v52
  %v69 = vpack.c.b16 %v55, %v54
  %v70 = vpack.c.b16 %v57, %v56
  %v71 = vpack.c.b16 %v59, %v58
  %v72 = vpack.c.b16 %v61, %v60
  %v73 = vpack.c.b16 %v63, %v62
  %v74 = vpack.c.b16 %v65, %v64
  %v75 = vpack.c.b16 %v67, %v66
  %84 = vmatprep.subr.bf16.mxu0 0
  %85 = vmatpush1.bf16.msra.mxu0 %v68
  %86 = vmatprep.subr.bf16.mxu0 0
  %87 = vmatpush1.bf16.msra.mxu0 %v69
  %88 = vmatprep.subr.bf16.mxu0 0
  %89 = vmatpush1.bf16.msra.mxu0 %v70
  %90 = vmatprep.subr.bf16.mxu0 0
  %91 = vmatpush1.bf16.msra.mxu0 %v71
  %92 = vmatprep.subr.bf16.mxu0 0
  %93 = vmatpush1.bf16.msra.mxu0 %v72
  %94 = vmatprep.subr.bf16.mxu0 0
  %95 = vmatpush1.bf16.msra.mxu0 %v73
  %96 = vmatprep.subr.bf16.mxu0 0
  %97 = vmatpush1.bf16.msra.mxu0 %v74
  %98 = vmatprep.subr.bf16.mxu0 0
  %99 = vmatpush1.bf16.msra.mxu0 %v75
  %100 = vmatprep.subr.bf16.mxu0 0
  %101 = vmatpush1.bf16.msra.mxu0 0
  %102 = vmatprep.subr.bf16.mxu0 0
  %103 = vmatpush1.bf16.msra.mxu0 0
  %104 = vmatprep.subr.bf16.mxu0 0
  %105 = vmatpush1.bf16.msra.mxu0 0
  %106 = vmatprep.subr.bf16.mxu0 0
  %107 = vmatpush1.bf16.msra.mxu0 0
  %108 = vmatprep.subr.bf16.mxu0 0
  %109 = vmatpush1.bf16.msra.mxu0 0
  %110 = vmatprep.subr.bf16.mxu0 0
  %111 = vmatpush1.bf16.msra.mxu0 0
  %112 = vmatprep.subr.bf16.mxu0 0
  %113 = vmatpush1.bf16.msra.mxu0 0
  %114 = vmatprep.subr.bf16.mxu0 0
  %115 = vmatpush1.bf16.msra.mxu0 0
  %116 = vmatprep.mubr.bf16.mxu0 0
  %117 = vmatmul.mubr.bf16.gmra.mrb[0].mxu0 %v34
  %v118 = vpop.f32.mrb[0].mxu0
  %v119 = vadd.f32 0.0, %v118
  %v120 = vpop.f32.mrb[0].mxu0
  %v121 = vpop.f32.mrb[0].mxu0
  %v122 = vadd.f32 0.0, %v121
  %v123 = vpop.f32.mrb[0].mxu0
  %124 = vdwg.mxu0
  %v125 = vpack.c.bf16 %v122, %v119
  %v127 = vunpack.c.l.b16 %v125
  %v128 = vunpack.c.h.b16 %v125
  %v129 = vpack.c.b16 %v127, %v127
  %v130 = vpack.c.b16 %v128, %v128
  %133 = vst [vmem:[%s2] sm:$0xf] %v129
  %134 = vst [vmem:[%s2 + $0x4] sm:$0xf] %v130
  // Predicated region
  $region10: #{gcn_forward.4} parent=0 // pred_check
    _
  $region11: #{gcn_forward.4} parent=0 // pred_check_branch
    %136 = sbr.rel (0) target = $region13
  $region12: #{gcn_forward.4} parent=0 // pred_region
    _
  $region13: #{gcn_forward.4} parent=0 // pred_fallthru
    _
  // Predicated region
  $region14: #{gcn_forward.4} parent=0 // pred_check
    _
  $region15: #{gcn_forward.4} parent=0 // pred_check_branch
    %138 = sbr.rel (0) target = $region17
  $region16: #{gcn_forward.4} parent=0 // pred_region
    _
  $region17: #{gcn_forward.4} parent=0 // pred_fallthru
    _

// kernel: gcn_forward.5
$region0: #{gcn_forward.5}
  #allocation0 [shape = 'u32[]', space=smem, size = 0x4, offset = 0x4, fixed_abs, tag = 'smem constant byte address 0x4 - core index']
  #allocation1 [shape = 'u32[144,128]{1,0:T(1,128)}', space=vmem, size = 0x12000, scoped, tag = 'internal scratch']
  #allocation2 [shape = 'f32[16,128]{1,0:T(8,128)}', space=vmem, size = 0x2000, scoped, tag = 'scratch operand']
  %s0 = inlined_call_operand.vmem [shape: bf16[16,16], index: 0, kind: input, shape index: {}]
  %s1 = inlined_call_operand.vmem [shape: bf16[16,128], index: 1, kind: input, shape index: {}]
  %s2 = inlined_call_operand.vmem [shape: f32[1,128], index: 2, kind: input, shape index: {}]
  %s3 = inlined_call_operand.vmem [shape: bf16[16,128], index: 3, kind: output, shape index: {}]
  %s4 = sld [smem:[#allocation0]]
  $region30: #{gcn_forward.5} parent=0
    _
  %s6 = ssub.s32 1, %s4
  %s7 = scalar_select 0, %s6, %s4
  // Predicated region
  $region2: #{gcn_forward.5} parent=0 // pred_check
    _
  $region3: #{gcn_forward.5} parent=0 // pred_check_branch
    %9 = sbr.rel (0) target = $region5
  $region4: #{gcn_forward.5} parent=0 // pred_region
    _
  $region5: #{gcn_forward.5} parent=0 // pred_fallthru
    _
  // Predicated region
  $region6: #{gcn_forward.5} parent=0 // pred_check
    _
  $region7: #{gcn_forward.5} parent=0 // pred_check_branch
    %11 = sbr.rel (0) target = $region9
  $region8: #{gcn_forward.5} parent=0 // pred_region
    _
  $region9: #{gcn_forward.5} parent=0 // pred_fallthru
    _
  // Predicated region
  $region10: #{gcn_forward.5} parent=0 // pred_check
    _
  $region11: #{gcn_forward.5} parent=0 // pred_check_branch
    %13 = sbr.rel (0) target = $region13
  $region12: #{gcn_forward.5} parent=0 // pred_region
    _
  $region13: #{gcn_forward.5} parent=0 // pred_fallthru
    _
  %p15 = scmp.eq.s32.totalorder 0, 0
  // Predicated region
  $region14: #{gcn_forward.5} parent=0 // pred_check
    %p16 = pneg %p15
  $region15: #{gcn_forward.5} parent=0 // pred_check_branch
    %18 = sbr.rel (%p16) target = $region17
  $region16: #{gcn_forward.5} parent=0 // pred_region
    %19 = vst [vmem:[#allocation2] sm:$0xff] 0.0
    %20 = vst [vmem:[#allocation2 + $0x8] sm:$0xff] 0.0
  $region17: #{gcn_forward.5} parent=0 // pred_fallthru
    _
  %s21 = smul.u32 0, 16
  %v22 = vld [vmem:[#allocation2] sm:$0xff]
  %v23 = vld [vmem:[#allocation2 + $0x8] sm:$0xff]
  %v24 = vld [vmem:[%s0] sm:$0xf]
  %v25 = vld [vmem:[%s0 + $0x4] sm:$0xf]
  %s26 = sshra.s32 %s21, 3
  %s27 = sand.u32 %s21, 7
  %s28 = smul.addr %s26, 4
  %s29 = scalar_lea.vmem %s1, %s28
  %v30 = vld [vmem:[%s29] sm:$0xf]
  %v31 = vld [vmem:[%s29 + $0x4] sm:$0xf]
  %v34 = vunpack.c.l.b16 %v24
  %v35 = vunpack.c.l.b16 %v25
  %v36 = vpack.c.b16 %v35, %v34
  %v39 = vunpack.c.l.b16 %v30
  %v40 = vunpack.c.l.b16 %v31
  %v41 = vpack.c.b16 %v40, %v39
  %vm43 = vcmask 130048
  %v45 = vsel %vm43, %v36, 0
  %47 = vmatprep.subr.bf16.mxu0 0
  %48 = vmatpush1.bf16.msra.mxu0 %v41
  %49 = vmatprep.subr.bf16.mxu0 0
  %50 = vmatpush1.bf16.msra.mxu0 0
  %51 = vmatprep.subr.bf16.mxu0 0
  %52 = vmatpush1.bf16.msra.mxu0 0
  %53 = vmatprep.subr.bf16.mxu0 0
  %54 = vmatpush1.bf16.msra.mxu0 0
  %55 = vmatprep.subr.bf16.mxu0 0
  %56 = vmatpush1.bf16.msra.mxu0 0
  %57 = vmatprep.subr.bf16.mxu0 0
  %58 = vmatpush1.bf16.msra.mxu0 0
  %59 = vmatprep.subr.bf16.mxu0 0
  %60 = vmatpush1.bf16.msra.mxu0 0
  %61 = vmatprep.subr.bf16.mxu0 0
  %62 = vmatpush1.bf16.msra.mxu0 0
  %63 = vmatprep.subr.bf16.mxu0 0
  %64 = vmatpush1.bf16.msra.mxu0 0
  %65 = vmatprep.subr.bf16.mxu0 0
  %66 = vmatpush1.bf16.msra.mxu0 0
  %67 = vmatprep.subr.bf16.mxu0 0
  %68 = vmatpush1.bf16.msra.mxu0 0
  %69 = vmatprep.subr.bf16.mxu0 0
  %70 = vmatpush1.bf16.msra.mxu0 0
  %71 = vmatprep.subr.bf16.mxu0 0
  %72 = vmatpush1.bf16.msra.mxu0 0
  %73 = vmatprep.subr.bf16.mxu0 0
  %74 = vmatpush1.bf16.msra.mxu0 0
  %75 = vmatprep.subr.bf16.mxu0 0
  %76 = vmatpush1.bf16.msra.mxu0 0
  %77 = vmatprep.subr.bf16.mxu0 0
  %78 = vmatpush1.bf16.msra.mxu0 0
  %79 = vmatprep.mubr.bf16.mxu0 0
  %80 = vmatmul.mubr.bf16.gmra.mrb[0].mxu0 %v45
  %v81 = vpop.f32.mrb[0].mxu0
  %v82 = vadd.f32 0.0, %v81
  %v83 = vpop.f32.mrb[0].mxu0
  %v84 = vpop.f32.mrb[0].mxu0
  %v85 = vadd.f32 0.0, %v84
  %v86 = vpop.f32.mrb[0].mxu0
  %87 = vdwg.mxu0
  %v88 = vadd.f32 %v22, %v82
  %v89 = vadd.f32 %v23, %v85
  %90 = vst [vmem:[#allocation2] sm:$0xff] %v88
  %91 = vst [vmem:[#allocation2 + $0x8] sm:$0xff] %v89
  // Predicated region
  $region18: #{gcn_forward.5} parent=0 // pred_check
    %p92 = pneg %p15
  $region19: #{gcn_forward.5} parent=0 // pred_check_branch
    %94 = sbr.rel (%p92) target = $region21
  $region20: #{gcn_forward.5} parent=0 // pred_region
    %v95 = vld [vmem:[#allocation2] sm:$0xff]
    %v96 = vld [vmem:[#allocation2 + $0x8] sm:$0xff]
    %v97 = vld [vmem:[%s2] sm:$0x1]
    %v99 = vlaneseq
    %v100 = vshrl.u32 %v99, 7
    %v101 = vsub.s32 0, %v100
    %v102 = vrot.slane %v97, %v101
    %v104 = vadd.f32 %v95, %v102
    %v105 = vadd.f32 %v96, %v102
    %v106 = vmax.f32 %v104, 0.0
    %v107 = vmax.f32 %v105, 0.0
    %v108 = vpack.c.bf16 %v107, %v106
    %v110 = vunpack.c.l.b16 %v108
    %v111 = vunpack.c.h.b16 %v108
    %v112 = vpack.c.b16 %v110, %v110
    %v113 = vpack.c.b16 %v111, %v111
    %116 = vst [vmem:[%s3] sm:$0xf] %v112
    %117 = vst [vmem:[%s3 + $0x4] sm:$0xf] %v113
  $region21: #{gcn_forward.5} parent=0 // pred_fallthru
    _
  // Predicated region
  $region22: #{gcn_forward.5} parent=0 // pred_check
    _
  $region23: #{gcn_forward.5} parent=0 // pred_check_branch
    %119 = sbr.rel (0) target = $region25
  $region24: #{gcn_forward.5} parent=0 // pred_region
    _
  $region25: #{gcn_forward.5} parent=0 // pred_fallthru
    _
  // Predicated region
  $region26: #{gcn_forward.5} parent=0 // pred_check
    _
  $region27: #{gcn_forward.5} parent=0 // pred_check_branch
    %121 = sbr.rel (0) target = $region29
  $region28: #{gcn_forward.5} parent=0 // pred_region
    _
  $region29: #{gcn_forward.5} parent=0 // pred_fallthru
    _

// kernel: gcn_forward.7
$region0: #{gcn_forward.7}
  #allocation0 [shape = 'u32[]', space=smem, size = 0x4, offset = 0x4, fixed_abs, tag = 'smem constant byte address 0x4 - core index']
  #allocation1 [shape = 'u32[144,128]{1,0:T(1,128)}', space=vmem, size = 0x12000, scoped, tag = 'internal scratch']
  #allocation2 [shape = 'f32[16,128]{1,0:T(8,128)}', space=vmem, size = 0x2000, scoped, tag = 'scratch operand']
  %s0 = inlined_call_operand.vmem [shape: bf16[16,16], index: 0, kind: input, shape index: {}]
  %s1 = inlined_call_operand.vmem [shape: bf16[16,128], index: 1, kind: input, shape index: {}]
  %s2 = inlined_call_operand.vmem [shape: f32[1,128], index: 2, kind: input, shape index: {}]
  %s3 = inlined_call_operand.vmem [shape: f32[16,128], index: 3, kind: output, shape index: {}]
  %s4 = sld [smem:[#allocation0]]
  $region30: #{gcn_forward.7} parent=0
    _
  %s6 = ssub.s32 1, %s4
  %s7 = scalar_select 0, %s6, %s4
  // Predicated region
  $region2: #{gcn_forward.7} parent=0 // pred_check
    _
  $region3: #{gcn_forward.7} parent=0 // pred_check_branch
    %9 = sbr.rel (0) target = $region5
  $region4: #{gcn_forward.7} parent=0 // pred_region
    _
  $region5: #{gcn_forward.7} parent=0 // pred_fallthru
    _
  // Predicated region
  $region6: #{gcn_forward.7} parent=0 // pred_check
    _
  $region7: #{gcn_forward.7} parent=0 // pred_check_branch
    %11 = sbr.rel (0) target = $region9
  $region8: #{gcn_forward.7} parent=0 // pred_region
    _
  $region9: #{gcn_forward.7} parent=0 // pred_fallthru
    _
  // Predicated region
  $region10: #{gcn_forward.7} parent=0 // pred_check
    _
  $region11: #{gcn_forward.7} parent=0 // pred_check_branch
    %13 = sbr.rel (0) target = $region13
  $region12: #{gcn_forward.7} parent=0 // pred_region
    _
  $region13: #{gcn_forward.7} parent=0 // pred_fallthru
    _
  %p15 = scmp.eq.s32.totalorder 0, 0
  // Predicated region
  $region14: #{gcn_forward.7} parent=0 // pred_check
    %p16 = pneg %p15
  $region15: #{gcn_forward.7} parent=0 // pred_check_branch
    %18 = sbr.rel (%p16) target = $region17
  $region16: #{gcn_forward.7} parent=0 // pred_region
    %19 = vst [vmem:[#allocation2] sm:$0xff] 0.0
    %20 = vst [vmem:[#allocation2 + $0x8] sm:$0xff] 0.0
  $region17: #{gcn_forward.7} parent=0 // pred_fallthru
    _
  %s21 = smul.u32 0, 16
  %v22 = vld [vmem:[#allocation2] sm:$0xff]
  %v23 = vld [vmem:[#allocation2 + $0x8] sm:$0xff]
  %v24 = vld [vmem:[%s0] sm:$0xf]
  %v25 = vld [vmem:[%s0 + $0x4] sm:$0xf]
  %s26 = sshra.s32 %s21, 3
  %s27 = sand.u32 %s21, 7
  %s28 = smul.addr %s26, 4
  %s29 = scalar_lea.vmem %s1, %s28
  %v30 = vld [vmem:[%s29] sm:$0xf]
  %v31 = vld [vmem:[%s29 + $0x4] sm:$0xf]
  %v34 = vunpack.c.l.b16 %v24
  %v35 = vunpack.c.l.b16 %v25
  %v36 = vpack.c.b16 %v35, %v34
  %v39 = vunpack.c.l.b16 %v30
  %v40 = vunpack.c.l.b16 %v31
  %v41 = vpack.c.b16 %v40, %v39
  %vm43 = vcmask 130048
  %v45 = vsel %vm43, %v36, 0
  %47 = vmatprep.subr.bf16.mxu0 0
  %48 = vmatpush1.bf16.msra.mxu0 %v41
  %49 = vmatprep.subr.bf16.mxu0 0
  %50 = vmatpush1.bf16.msra.mxu0 0
  %51 = vmatprep.subr.bf16.mxu0 0
  %52 = vmatpush1.bf16.msra.mxu0 0
  %53 = vmatprep.subr.bf16.mxu0 0
  %54 = vmatpush1.bf16.msra.mxu0 0
  %55 = vmatprep.subr.bf16.mxu0 0
  %56 = vmatpush1.bf16.msra.mxu0 0
  %57 = vmatprep.subr.bf16.mxu0 0
  %58 = vmatpush1.bf16.msra.mxu0 0
  %59 = vmatprep.subr.bf16.mxu0 0
  %60 = vmatpush1.bf16.msra.mxu0 0
  %61 = vmatprep.subr.bf16.mxu0 0
  %62 = vmatpush1.bf16.msra.mxu0 0
  %63 = vmatprep.subr.bf16.mxu0 0
  %64 = vmatpush1.bf16.msra.mxu0 0
  %65 = vmatprep.subr.bf16.mxu0 0
  %66 = vmatpush1.bf16.msra.mxu0 0
  %67 = vmatprep.subr.bf16.mxu0 0
  %68 = vmatpush1.bf16.msra.mxu0 0
  %69 = vmatprep.subr.bf16.mxu0 0
  %70 = vmatpush1.bf16.msra.mxu0 0
  %71 = vmatprep.subr.bf16.mxu0 0
  %72 = vmatpush1.bf16.msra.mxu0 0
  %73 = vmatprep.subr.bf16.mxu0 0
  %74 = vmatpush1.bf16.msra.mxu0 0
  %75 = vmatprep.subr.bf16.mxu0 0
  %76 = vmatpush1.bf16.msra.mxu0 0
  %77 = vmatprep.subr.bf16.mxu0 0
  %78 = vmatpush1.bf16.msra.mxu0 0
  %79 = vmatprep.mubr.bf16.mxu0 0
  %80 = vmatmul.mubr.bf16.gmra.mrb[0].mxu0 %v45
  %v81 = vpop.f32.mrb[0].mxu0
  %v82 = vadd.f32 0.0, %v81
  %v83 = vpop.f32.mrb[0].mxu0
  %v84 = vpop.f32.mrb[0].mxu0
  %v85 = vadd.f32 0.0, %v84
  %v86 = vpop.f32.mrb[0].mxu0
  %87 = vdwg.mxu0
  %v88 = vadd.f32 %v22, %v82
  %v89 = vadd.f32 %v23, %v85
  %90 = vst [vmem:[#allocation2] sm:$0xff] %v88
  %91 = vst [vmem:[#allocation2 + $0x8] sm:$0xff] %v89
  // Predicated region
  $region18: #{gcn_forward.7} parent=0 // pred_check
    %p92 = pneg %p15
  $region19: #{gcn_forward.7} parent=0 // pred_check_branch
    %94 = sbr.rel (%p92) target = $region21
  $region20: #{gcn_forward.7} parent=0 // pred_region
    %v95 = vld [vmem:[#allocation2] sm:$0xff]
    %v96 = vld [vmem:[#allocation2 + $0x8] sm:$0xff]
    %v97 = vld [vmem:[%s2] sm:$0x1]
    %v99 = vlaneseq
    %v100 = vshrl.u32 %v99, 7
    %v101 = vsub.s32 0, %v100
    %v102 = vrot.slane %v97, %v101
    %v104 = vadd.f32 %v95, %v102
    %v105 = vadd.f32 %v96, %v102
    %106 = vmax.xlane.f32.xlu0 %v104
    %v107 = vpop.xlane.xlu0 %106
    %108 = vmax.xlane.f32.xlu0 %v105
    %v109 = vpop.xlane.xlu0 %108
    %v110 = vsub.f32 %v104, %v107
    %v111 = vsub.f32 %v105, %v109
    %v112 = vmul.f32 %v110, 1.442695
    %v113 = vpow.pop %v112
    %v114 = vmul.f32 %v111, 1.442695
    %v115 = vpow.pop %v114
    %116 = vadd.xlane.f32.xlu0 %v113
    %v117 = vpop.xlane.xlu0 %116
    %118 = vadd.xlane.f32.xlu0 %v115
    %v119 = vpop.xlane.xlu0 %118
    %v120 = vlog2.pop %v117
    %v121 = vmul.f32 %v120, 0.6931472
    %v122 = vlog2.pop %v119
    %v123 = vmul.f32 %v122, 0.6931472
    %v124 = vsub.f32 %v110, %v121
    %v125 = vsub.f32 %v111, %v123
    %126 = vst [vmem:[%s3] sm:$0xff] %v124
    %127 = vst [vmem:[%s3 + $0x8] sm:$0xff] %v125
  $region21: #{gcn_forward.7} parent=0 // pred_fallthru
    _
  // Predicated region
  $region22: #{gcn_forward.7} parent=0 // pred_check
    _
  $region23: #{gcn_forward.7} parent=0 // pred_check_branch
    %129 = sbr.rel (0) target = $region25
  $region24: #{gcn_forward.7} parent=0 // pred_region
    _
  $region25: #{gcn_forward.7} parent=0 // pred_fallthru
    _
  // Predicated region
  $region26: #{gcn_forward.7} parent=0 // pred_check
    _
  $region27: #{gcn_forward.7} parent=0 // pred_check_branch
    %131 = sbr.rel (0) target = $region29
  $region28: #{gcn_forward.7} parent=0 // pred_region
    _
  $region29: #{gcn_forward.7} parent=0 // pred_fallthru
    _

</llo_original>
